<compile_context>
chip_gen: v6e
topology: v6e:2x2x1
jax: 0.10.0
libtpu: 0.0.40
codegen_flags: <defaults>
</compile_context>

<pallas_src>
import functools

import jax
import jax.numpy as jnp
from jax.experimental import pallas as pl
from jax.experimental.pallas import tpu as pltpu


LANE = 128


def _round_up(n, m):
    return (n + m - 1) // m * m


def _policy_kernel(n_layers, n_actions, x_ref, u_ref, *refs):
    """refs = (W0, b0, ..., W_{L-1}, b_{L-1}, out_ref).

    out_ref is a single lane-dense f32 slab of width out_w:
      lanes [0, n_actions) -> softmax probs
      lane  n_actions      -> log_prob(sampled action)
      lane  n_actions + 1  -> sampled action (stored as f32)
    """
    param_refs = refs[:2 * n_layers]
    out_ref = refs[-1]

    # ---- MLP: logits = net(state); bf16 MXU feeds, f32 accumulation ----------
    h = x_ref[...]
    for i in range(n_layers):
        w_ref = param_refs[2 * i]
        b_ref = param_refs[2 * i + 1]
        acc = jnp.dot(h.astype(w_ref.dtype), w_ref[...],
                      preferred_element_type=jnp.float32)
        h = acc + b_ref[...].astype(jnp.float32)     # bias add in f32
        if i < n_layers - 1:
            h = jnp.maximum(h, 0.0)                   # ReLU in f32
    logits = h                                        # (tile_b, a_pad), f32

    a_pad = logits.shape[-1]
    col = jax.lax.broadcasted_iota(jnp.int32, logits.shape, 1)
    valid = col < n_actions
    neg_big = jnp.float32(-1e30)

    # ---- masked softmax (reductions 1 & 2: row max, denom) -------------------
    logits_m = jnp.where(valid, logits, neg_big)
    row_max = jnp.max(logits_m, axis=-1, keepdims=True)
    unnorm = jnp.where(valid, jnp.exp(logits_m - row_max), 0.0)
    denom = jnp.sum(unnorm, axis=-1, keepdims=True)
    probs = unnorm / denom

    # ---- categorical sample via exponential race (reduction 3) ---------------
    # TODO(synk): same distribution as torch Categorical.sample(), but not the
    # same random stream (uniforms come from jax.random in the wrapper).
    u = u_ref[...].astype(jnp.float32)                # uniform in (0, 1)
    e = -jnp.log(u)                                   # Exp(1); single log per elem
    score = unnorm / e                                # >= 0; exactly 0 on padded lanes

    # Pack (score, lane index) into one sortable int32 key so a single max
    # yields the argmax.  Low mantissa bits are sacrificed for the index, which
    # perturbs the sample only at ~2^-16 relative score resolution.
    idx_bits = max((a_pad - 1).bit_length(), 1)
    low_mask = (1 << idx_bits) - 1
    score_bits = jax.lax.bitcast_convert_type(score, jnp.int32)  # monotone for score>=0
    key = jnp.bitwise_or(jnp.bitwise_and(score_bits, jnp.int32(~low_mask)), col)
    best_key = jnp.max(key, axis=-1, keepdims=True)
    action = jnp.bitwise_and(best_key, jnp.int32(low_mask))      # (tile_b, 1) int32

    # ---- log_prob(action) = log_softmax(logits)[action]  (reduction 4) -------
    log_softmax = logits - row_max - jnp.log(denom)
    logp = jnp.sum(jnp.where(col == action, log_softmax, 0.0),
                   axis=-1, keepdims=True)

    # ---- single lane-dense output slab ---------------------------------------
    out_w = out_ref.shape[-1]
    probs_full = probs
    if out_w != a_pad:
        probs_full = jnp.concatenate(
            [probs, jnp.zeros((probs.shape[0], out_w - a_pad), probs.dtype)],
            axis=-1)
    ocol = jax.lax.broadcasted_iota(jnp.int32, out_ref.shape, 1)
    packed = jnp.where(ocol < n_actions, probs_full,
                       jnp.where(ocol == n_actions, logp,
                                 jnp.where(ocol == n_actions + 1,
                                           action.astype(jnp.float32), 0.0)))
    out_ref[...] = packed.astype(out_ref.dtype)


def pad_policy_params(params, lane=LANE, dtype=jnp.bfloat16):
    """Zero-pad (W, b) so every feature dim is a multiple of 128 lanes, and cast
    to bf16 (MXU-native on every TPU generation; accumulation stays f32)."""
    padded = []
    for w, b in params:
        d_in, d_out = w.shape
        di_p, do_p = _round_up(d_in, lane), _round_up(d_out, lane)
        w_p = jnp.zeros((di_p, do_p), dtype).at[:d_in, :d_out].set(w.astype(dtype))
        b_p = jnp.zeros((1, do_p), dtype).at[:, :d_out].set(
            b.reshape(1, -1).astype(dtype))
        padded.append((w_p, b_p))
    return padded


def policy_forward(x, padded_params, n_actions, key, *, max_tile_b=1024):
    """x: (batch, in_features) f32.  padded_params: list of bf16 (W_pad, b_pad).

    Returns (action int32 (B,), log_prob f32 (B,), probs f32 (B, n_actions)).
    """
    n_layers = len(padded_params)
    batch, in_features = x.shape
    f_pad = padded_params[0][0].shape[0]
    a_pad = padded_params[-1][0].shape[1]
    out_w = a_pad if n_actions + 2 <= a_pad else _round_up(n_actions + 2, LANE)

    # Few fat batch tiles: amortizes per-grid-step overhead, avoids over-padding
    # the batch, and (>=2 tiles when batch allows) lets the "parallel" axis
    # shard across v7x's two TensorCores.
    n_tiles = max(2, pl.cdiv(batch, max_tile_b))
    tile_b = _round_up(pl.cdiv(batch, n_tiles), 8)
    b_pad = _round_up(batch, tile_b)
    grid = b_pad // tile_b

    x_p = jnp.pad(x, ((0, b_pad - batch), (0, f_pad - in_features)))
    # Uniforms for the in-kernel categorical sample (batch-tiled input; minval
    # keeps -log(u) finite).
    u = jax.random.uniform(key, (b_pad, a_pad), jnp.float32,
                           minval=1e-12, maxval=1.0)

    flat_params = []
    in_specs = [pl.BlockSpec((tile_b, f_pad), lambda i: (i, 0)),
                pl.BlockSpec((tile_b, a_pad), lambda i: (i, 0))]
    for w, b in padded_params:
        flat_params += [w, b]
        # Constant index_map -> weights/biases stay VMEM-resident across tiles.
        # (pipeline_mode=pl.Buffered(1) would halve their VMEM; irrelevant at
        # this size, so left at the default for maximum lowering compatibility.)
        in_specs.append(pl.BlockSpec(w.shape, lambda i: (0, 0)))
        in_specs.append(pl.BlockSpec(b.shape, lambda i: (0, 0)))

    out_spec = pl.BlockSpec((tile_b, out_w), lambda i: (i, 0))
    out_shape = jax.ShapeDtypeStruct((b_pad, out_w), jnp.float32)

    # VMEM budget: resident (double-buffered) weights + pipelined act/out tiles.
    weight_bytes = sum(int(w.size) * w.dtype.itemsize + int(b.size) * b.dtype.itemsize
                       for w, b in padded_params)
    tile_bytes = tile_b * (f_pad + a_pad + out_w) * 4
    est = 2 * weight_bytes + 2 * tile_bytes
    vmem_limit = int(min(48 << 20, max(16 << 20, 2 * est)))   # headroom on v7x 64 MiB

    flops = 2 * b_pad * sum(w.shape[0] * w.shape[1] for w, _ in padded_params)
    cost = pl.CostEstimate(
        flops=flops,
        transcendentals=2 * b_pad * a_pad,     # exp + log per logit lane
        bytes_accessed=int(x_p.size * 4 + u.size * 4 + weight_bytes
                           + b_pad * out_w * 4))

    kernel = functools.partial(_policy_kernel, n_layers, n_actions)

    out = pl.pallas_call(
        kernel,
        out_shape=out_shape,
        grid_spec=pltpu.PrefetchScalarGridSpec(
            num_scalar_prefetch=0,
            grid=(grid,),
            in_specs=in_specs,
            out_specs=out_spec,
        ),
        compiler_params=pltpu.CompilerParams(
            dimension_semantics=("parallel",),   # batch tiles across TCs (v7x)
            vmem_limit_bytes=vmem_limit,
        ),
        cost_estimate=cost,
    )(x_p, u, *flat_params)

    probs = out[:batch, :n_actions]
    log_prob = out[:batch, n_actions]
    action = out[:batch, n_actions + 1].astype(jnp.int32)
    return action, log_prob, probs


def init_mlp_params(key, in_features, out_features, hidden=64, layers=1,
                    dtype=jnp.float32):
    """PyTorch-Linear-style init; weights pre-transposed to (d_in, d_out)."""
    dims = []
    for i in range(layers):
        dims.append((in_features if i == 0 else hidden, hidden))
    dims.append((hidden, out_features))

    params = []
    for (d_in, d_out) in dims:
        key, kw, kb = jax.random.split(key, 3)
        bound = 1.0 / (d_in ** 0.5)
        w = jax.random.uniform(kw, (d_in, d_out), dtype, minval=-bound, maxval=bound)
        b = jax.random.uniform(kb, (1, d_out), dtype, minval=-bound, maxval=bound)
        params.append((w, b))
    return params


if __name__ == "__main__":
    key = jax.random.PRNGKey(0)

    batch, in_features, hidden, out_features, layers = 8, 16, 64, 8, 1

    kx, kp, ku = jax.random.split(key, 3)
    x = jax.random.normal(kx, (batch, in_features), dtype=jnp.float32)
    params = init_mlp_params(kp, in_features, out_features,
                             hidden=hidden, layers=layers)
    padded_params = pad_policy_params(params)          # bf16, lane-padded

    action, log_prob, probs = policy_forward(x, padded_params, out_features, ku)
    action, log_prob, probs = jax.block_until_ready((action, log_prob, probs))

    # Pure-JAX reference for the deterministic part of Policy.forward, using the
    # same bf16 weights / f32 accumulation as the kernel.
    h = x
    for i, (w, b) in enumerate(params):
        w16 = w.astype(jnp.bfloat16)
        b16 = b.astype(jnp.bfloat16)
        h = jnp.dot(h.astype(jnp.bfloat16), w16,
                    preferred_element_type=jnp.float32) + b16.astype(jnp.float32)
        if i < len(params) - 1:
            h = jnp.maximum(h, 0.0)
    probs_ref = jax.nn.softmax(h, axis=1)
    log_softmax_ref = jax.nn.log_softmax(h, axis=1)

    assert probs.shape == (batch, out_features), probs.shape
    assert jnp.allclose(probs, probs_ref, atol=2e-3, rtol=2e-3), "probs mismatch"
    assert jnp.allclose(jnp.sum(probs, axis=1), 1.0, atol=1e-5), "probs not normalized"
    assert bool(jnp.all((action >= 0) & (action < out_features))), "action out of range"
    logp_ref = jnp.take_along_axis(log_softmax_ref, action[:, None], axis=1)[:, 0]
    assert jnp.allclose(log_prob, logp_ref, atol=2e-3, rtol=2e-3), "log_prob mismatch"

    action_list = [int(a) for a in action]   # mirrors torch's action.tolist()
    assert len(action_list) == batch

    print("KERNEL_OK")
</pallas_src>

<mosaic_0001>
module attributes {stable_mosaic.version = 11 : i64} {
  func.func @_policy_kernel(%arg0: i32, %arg1: memref<8x128xf32, #tpu.memory_space<vmem>>, %arg2: memref<8x128xf32, #tpu.memory_space<vmem>>, %arg3: memref<128x128xbf16, #tpu.memory_space<vmem>>, %arg4: memref<1x128xbf16, #tpu.memory_space<vmem>>, %arg5: memref<128x128xbf16, #tpu.memory_space<vmem>>, %arg6: memref<1x128xbf16, #tpu.memory_space<vmem>>, %arg7: memref<8x128xf32, #tpu.memory_space<vmem>>) attributes {dimension_semantics = [#tpu.dimension_semantics<parallel>], iteration_bounds = array<i64: 1>, scalar_prefetch = 0 : i64, scratch_operands = 0 : i64, tpu.core_type = #tpu.core_type<tc>, window_params = [{transform_indices = @transform_0, window_bounds = array<i64: 8, 128>}, {transform_indices = @transform_1, window_bounds = array<i64: 8, 128>}, {pipeline_mode = #tpu.pipeline_mode<synchronous>, transform_indices = @transform_2, window_bounds = array<i64: 128, 128>}, {pipeline_mode = #tpu.pipeline_mode<synchronous>, transform_indices = @transform_3, window_bounds = array<i64: 1, 128>}, {pipeline_mode = #tpu.pipeline_mode<synchronous>, transform_indices = @transform_4, window_bounds = array<i64: 128, 128>}, {pipeline_mode = #tpu.pipeline_mode<synchronous>, transform_indices = @transform_5, window_bounds = array<i64: 1, 128>}, {transform_indices = @transform_6, window_bounds = array<i64: 8, 128>}]} {
    %c0 = arith.constant 0 : index
    %c0_0 = arith.constant 0 : index
    %0 = vector.load %arg1[%c0, %c0_0] : memref<8x128xf32, #tpu.memory_space<vmem>>, vector<8x128xf32>
    %1 = arith.truncf %0 : vector<8x128xf32> to vector<8x128xbf16>
    %c0_1 = arith.constant 0 : index
    %c0_2 = arith.constant 0 : index
    %2 = vector.load %arg3[%c0_1, %c0_2] : memref<128x128xbf16, #tpu.memory_space<vmem>>, vector<128x128xbf16>
    %cst = arith.constant dense<0.000000e+00> : vector<8x128xf32>
    %3 = tpu.matmul %1, %2, %cst {dimension_numbers = #tpu.dot_dimension_numbers<[1], [0], [0], [1], [0, 0, 1, 1], [], []>} : vector<8x128xbf16>, vector<128x128xbf16>, vector<8x128xf32> -> vector<8x128xf32>
    %c0_3 = arith.constant 0 : index
    %c0_4 = arith.constant 0 : index
    %4 = vector.load %arg4[%c0_3, %c0_4] : memref<1x128xbf16, #tpu.memory_space<vmem>>, vector<1x128xbf16>
    %5 = arith.extf %4 : vector<1x128xbf16> to vector<1x128xf32>
    %6 = vector.broadcast %5 : vector<1x128xf32> to vector<8x128xf32>
    %7 = arith.addf %3, %6 : vector<8x128xf32>
    %cst_5 = arith.constant 0.000000e+00 : f32
    %8 = vector.broadcast %cst_5 : f32 to vector<8x128xf32>
    %9 = arith.maximumf %7, %8 : vector<8x128xf32>
    %10 = arith.truncf %9 : vector<8x128xf32> to vector<8x128xbf16>
    %c0_6 = arith.constant 0 : index
    %c0_7 = arith.constant 0 : index
    %11 = vector.load %arg5[%c0_6, %c0_7] : memref<128x128xbf16, #tpu.memory_space<vmem>>, vector<128x128xbf16>
    %cst_8 = arith.constant dense<0.000000e+00> : vector<8x128xf32>
    %12 = tpu.matmul %10, %11, %cst_8 {dimension_numbers = #tpu.dot_dimension_numbers<[1], [0], [0], [1], [0, 0, 1, 1], [], []>} : vector<8x128xbf16>, vector<128x128xbf16>, vector<8x128xf32> -> vector<8x128xf32>
    %c0_9 = arith.constant 0 : index
    %c0_10 = arith.constant 0 : index
    %13 = vector.load %arg6[%c0_9, %c0_10] : memref<1x128xbf16, #tpu.memory_space<vmem>>, vector<1x128xbf16>
    %14 = arith.extf %13 : vector<1x128xbf16> to vector<1x128xf32>
    %15 = vector.broadcast %14 : vector<1x128xf32> to vector<8x128xf32>
    %16 = arith.addf %12, %15 : vector<8x128xf32>
    %17 = tpu.iota {dimensions = array<i32: 1>} : vector<8x128xi32>
    %c8_i32 = arith.constant 8 : i32
    %18 = vector.broadcast %c8_i32 : i32 to vector<8x128xi32>
    %19 = arith.cmpi slt, %17, %18 : vector<8x128xi32>
    %cst_11 = arith.constant -1.000000e+30 : f32
    %20 = vector.broadcast %cst_11 : f32 to vector<8x128xf32>
    %21 = arith.select %19, %16, %20 : vector<8x128xi1>, vector<8x128xf32>
    %cst_12 = arith.constant dense<0xFF800000> : vector<8xf32>
    %22 = vector.multi_reduction <maximumf>, %21, %cst_12 [1] : vector<8x128xf32> to vector<8xf32>
    %23 = vector.shape_cast %22 : vector<8xf32> to vector<8x1xf32>
    %24 = vector.broadcast %23 : vector<8x1xf32> to vector<8x128xf32>
    %25 = arith.subf %21, %24 : vector<8x128xf32>
    %26 = math.exp %25 : vector<8x128xf32>
    %cst_13 = arith.constant 0.000000e+00 : f32
    %27 = vector.broadcast %cst_13 : f32 to vector<8x128xf32>
    %28 = arith.select %19, %26, %27 : vector<8x128xi1>, vector<8x128xf32>
    %cst_14 = arith.constant dense<0.000000e+00> : vector<8xf32>
    %29 = vector.multi_reduction <add>, %28, %cst_14 [1] : vector<8x128xf32> to vector<8xf32>
    %30 = vector.shape_cast %29 : vector<8xf32> to vector<8x1xf32>
    %31 = vector.broadcast %30 : vector<8x1xf32> to vector<8x128xf32>
    %32 = arith.divf %28, %31 : vector<8x128xf32>
    %c0_15 = arith.constant 0 : index
    %c0_16 = arith.constant 0 : index
    %33 = vector.load %arg2[%c0_15, %c0_16] : memref<8x128xf32, #tpu.memory_space<vmem>>, vector<8x128xf32>
    %34 = math.log %33 : vector<8x128xf32>
    %cst_17 = arith.constant 0.000000e+00 : f32
    %35 = vector.broadcast %cst_17 : f32 to vector<8x128xf32>
    %36 = arith.subf %35, %34 : vector<8x128xf32>
    %37 = arith.divf %28, %36 : vector<8x128xf32>
    %38 = tpu.bitcast %37 : vector<8x128xf32> -> vector<8x128xi32>
    %c-128_i32 = arith.constant -128 : i32
    %39 = vector.broadcast %c-128_i32 : i32 to vector<8x128xi32>
    %40 = arith.andi %38, %39 : vector<8x128xi32>
    %41 = arith.ori %40, %17 : vector<8x128xi32>
    %cst_18 = arith.constant dense<-2147483648> : vector<8xi32>
    %42 = vector.multi_reduction <maxsi>, %41, %cst_18 [1] : vector<8x128xi32> to vector<8xi32>
    %43 = vector.shape_cast %42 : vector<8xi32> to vector<8x1xi32>
    %c127_i32 = arith.constant 127 : i32
    %44 = vector.broadcast %c127_i32 : i32 to vector<8x1xi32>
    %45 = arith.andi %43, %44 : vector<8x1xi32>
    %46 = vector.broadcast %23 : vector<8x1xf32> to vector<8x128xf32>
    %47 = arith.subf %16, %46 : vector<8x128xf32>
    %48 = math.log %30 : vector<8x1xf32>
    %49 = vector.broadcast %48 : vector<8x1xf32> to vector<8x128xf32>
    %50 = arith.subf %47, %49 : vector<8x128xf32>
    %51 = vector.broadcast %45 : vector<8x1xi32> to vector<8x128xi32>
    %52 = arith.cmpi eq, %17, %51 : vector<8x128xi32>
    %cst_19 = arith.constant 0.000000e+00 : f32
    %53 = vector.broadcast %cst_19 : f32 to vector<8x128xf32>
    %54 = arith.select %52, %50, %53 : vector<8x128xi1>, vector<8x128xf32>
    %cst_20 = arith.constant dense<0.000000e+00> : vector<8xf32>
    %55 = vector.multi_reduction <add>, %54, %cst_20 [1] : vector<8x128xf32> to vector<8xf32>
    %56 = vector.shape_cast %55 : vector<8xf32> to vector<8x1xf32>
    %57 = tpu.iota {dimensions = array<i32: 1>} : vector<8x128xi32>
    %c8_i32_21 = arith.constant 8 : i32
    %58 = vector.broadcast %c8_i32_21 : i32 to vector<8x128xi32>
    %59 = arith.cmpi slt, %57, %58 : vector<8x128xi32>
    %c8_i32_22 = arith.constant 8 : i32
    %60 = vector.broadcast %c8_i32_22 : i32 to vector<8x128xi32>
    %61 = arith.cmpi eq, %57, %60 : vector<8x128xi32>
    %c9_i32 = arith.constant 9 : i32
    %62 = vector.broadcast %c9_i32 : i32 to vector<8x128xi32>
    %63 = arith.cmpi eq, %57, %62 : vector<8x128xi32>
    %64 = arith.sitofp %45 : vector<8x1xi32> to vector<8x1xf32>
    %cst_23 = arith.constant 0.000000e+00 : f32
    %65 = vector.shape_cast %64 : vector<8x1xf32> to vector<8x1xf32>
    %66 = vector.broadcast %65 : vector<8x1xf32> to vector<8x128xf32>
    %67 = vector.broadcast %cst_23 : f32 to vector<8x128xf32>
    %68 = arith.select %63, %66, %67 : vector<8x128xi1>, vector<8x128xf32>
    %69 = vector.shape_cast %56 : vector<8x1xf32> to vector<8x1xf32>
    %70 = vector.broadcast %69 : vector<8x1xf32> to vector<8x128xf32>
    %71 = arith.select %61, %70, %68 : vector<8x128xi1>, vector<8x128xf32>
    %72 = arith.select %59, %32, %71 : vector<8x128xi1>, vector<8x128xf32>
    %c0_24 = arith.constant 0 : index
    %c0_25 = arith.constant 0 : index
    %73 = vector.load %arg7[%c0_24, %c0_25] : memref<8x128xf32, #tpu.memory_space<vmem>>, vector<8x128xf32>
    tpu.vector_store %arg7[%c0_24, %c0_25], %72 {strides = array<i32>} : memref<8x128xf32, #tpu.memory_space<vmem>>, vector<8x128xf32>,
    return
  }
  func.func @transform_0(%arg0: i32) -> (i32, i32) {
    %c0_i32 = arith.constant 0 : i32
    %c0_i32_0 = arith.constant 0 : i32
    return %arg0, %c0_i32 : i32, i32
  }
  func.func @transform_1(%arg0: i32) -> (i32, i32) {
    %c0_i32 = arith.constant 0 : i32
    %c0_i32_0 = arith.constant 0 : i32
    return %arg0, %c0_i32 : i32, i32
  }
  func.func @transform_2(%arg0: i32) -> (i32, i32) {
    %c0_i32 = arith.constant 0 : i32
    %c0_i32_0 = arith.constant 0 : i32
    %c0_i32_1 = arith.constant 0 : i32
    return %c0_i32, %c0_i32_0 : i32, i32
  }
  func.func @transform_3(%arg0: i32) -> (i32, i32) {
    %c0_i32 = arith.constant 0 : i32
    %c0_i32_0 = arith.constant 0 : i32
    %c0_i32_1 = arith.constant 0 : i32
    return %c0_i32, %c0_i32_0 : i32, i32
  }
  func.func @transform_4(%arg0: i32) -> (i32, i32) {
    %c0_i32 = arith.constant 0 : i32
    %c0_i32_0 = arith.constant 0 : i32
    %c0_i32_1 = arith.constant 0 : i32
    return %c0_i32, %c0_i32_0 : i32, i32
  }
  func.func @transform_5(%arg0: i32) -> (i32, i32) {
    %c0_i32 = arith.constant 0 : i32
    %c0_i32_0 = arith.constant 0 : i32
    %c0_i32_1 = arith.constant 0 : i32
    return %c0_i32, %c0_i32_0 : i32, i32
  }
  func.func @transform_6(%arg0: i32) -> (i32, i32) {
    %c0_i32 = arith.constant 0 : i32
    %c0_i32_0 = arith.constant 0 : i32
    return %arg0, %c0_i32 : i32, i32
  }
}

</mosaic_0001>

<llo_original>
// kernel: tpu_custom_call.1
$region0: #{tpu_custom_call.1}
  #allocation0 [shape = 'u32[]', space=smem, size = 0x4, offset = 0x4, fixed_abs, tag = 'smem constant byte address 0x4 - core index']
  #allocation1 [shape = 'u32[144,128]{1,0:T(1,128)}', space=vmem, size = 0x12000, scoped, tag = 'internal scratch']
  %s0 = inlined_call_operand.hbm [shape: f32[8,128], index: 0, kind: input, shape index: {}]
  %s1 = inlined_call_operand.hbm [shape: f32[8,128], index: 1, kind: input, shape index: {}]
  %s2 = inlined_call_operand.hbm [shape: bf16[128,128], index: 2, kind: input, shape index: {}]
  %s3 = inlined_call_operand.vmem [shape: bf16[1,128], index: 3, kind: input, shape index: {}]
  %s4 = inlined_call_operand.hbm [shape: bf16[128,128], index: 4, kind: input, shape index: {}]
  %s5 = inlined_call_operand.vmem [shape: bf16[1,128], index: 5, kind: input, shape index: {}]
  %s6 = inlined_call_operand.hbm [shape: f32[8,128], index: 6, kind: output, shape index: {}]
  %s7 = sld [smem:[#allocation0]]
  $region50: #{tpu_custom_call.1} parent=0
    _
  %s9 = ssub.s32 1, %s7
  %s10 = scalar_select 0, %s9, %s7
  $region1: #{tpu_custom_call.1} parent=0
    #allocation2 [shape = 'u8[4096]{0}', space=vmem, size = 0x1000, scoped, tag = 'input window, operand 0, single buffered']
    #allocation3 [shape = 's32[1]{0}', space=sflag, size = 0x4, scoped, tag = 'scoped memory for tpu_custom_call.1']
    #allocation4 [shape = 's32[1]{0}', space=sflag, size = 0x4, scoped, tag = 'scoped memory for tpu_custom_call.1']
    #allocation5 [shape = 'u8[4096]{0}', space=vmem, size = 0x1000, scoped, tag = 'input window, operand 1, single buffered']
    #allocation6 [shape = 's32[1]{0}', space=sflag, size = 0x4, scoped, tag = 'scoped memory for tpu_custom_call.1']
    #allocation7 [shape = 'u8[32768]{0}', space=vmem, size = 0x8000, scoped, tag = 'input window, operand 2, single buffered']
    #allocation8 [shape = 'u8[32768]{0}', space=vmem, size = 0x8000, scoped, tag = 'input window, operand 4, single buffered']
    #allocation9 [shape = 's32[1]{0}', space=sflag, size = 0x4, scoped, tag = 'scoped memory for tpu_custom_call.1']
    #allocation10 [shape = 'u8[4096]{0}', space=vmem, size = 0x1000, scoped, tag = 'output window, operand 0, single buffered']
    %11 = vsyncpa [#allocation3], 0
    %12 = vsyncpa [#allocation6], 0
    %13 = vsyncpa [#allocation9], 0
    %14 = vsyncpa [#allocation4], 0
    // Predicated region
    $region2: #{tpu_custom_call.1} parent=1 // pred_check
      _
    $region3: #{tpu_custom_call.1} parent=1 // pred_check_branch
      %16 = sbr.rel (0) target = $region5
    $region4: #{tpu_custom_call.1} parent=1 // pred_region
      %s18 = ssub.s32 128, 128
      %19 = vsyncadd [#allocation3], %s18
      %s21 = sshll.u32 [#allocation2], 4
      %s22 = int_to_ptr.vmem [resolvable:$true] %s21
      %24 = dma.hbm_to_vmem [thread:$0]  %s0, 128, %s22, [#allocation3]
    $region5: #{tpu_custom_call.1} parent=1 // pred_fallthru
      _
    // Predicated region
    $region6: #{tpu_custom_call.1} parent=1 // pred_check
      _
    $region7: #{tpu_custom_call.1} parent=1 // pred_check_branch
      %26 = sbr.rel (0) target = $region9
    $region8: #{tpu_custom_call.1} parent=1 // pred_region
      %s28 = ssub.s32 128, 128
      %29 = vsyncadd [#allocation6], %s28
      %s31 = sshll.u32 [#allocation5], 4
      %s32 = int_to_ptr.vmem [resolvable:$true] %s31
      %34 = dma.hbm_to_vmem [thread:$0]  %s1, 128, %s32, [#allocation6]
    $region9: #{tpu_custom_call.1} parent=1 // pred_fallthru
      _
    // Predicated region
    $region10: #{tpu_custom_call.1} parent=1 // pred_check
      _
    $region11: #{tpu_custom_call.1} parent=1 // pred_check_branch
      %36 = sbr.rel (0) target = $region13
    $region12: #{tpu_custom_call.1} parent=1 // pred_region
      %s38 = ssub.s32 1024, 1024
      %39 = vsyncadd [#allocation6], %s38
      %s40 = sshll.u32 [#allocation7], 4
      %s41 = int_to_ptr.vmem [resolvable:$true] %s40
      %46 = dma.hbm_to_vmem [thread:$0]  %s2, 1024, %s41, [#allocation6], 64, 64, 4
    $region13: #{tpu_custom_call.1} parent=1 // pred_fallthru
      _
    // Predicated region
    $region14: #{tpu_custom_call.1} parent=1 // pred_check
      _
    $region15: #{tpu_custom_call.1} parent=1 // pred_check_branch
      %48 = sbr.rel (0) target = $region17
    $region16: #{tpu_custom_call.1} parent=1 // pred_region
      _
    $region17: #{tpu_custom_call.1} parent=1 // pred_fallthru
      _
    // Predicated region
    $region18: #{tpu_custom_call.1} parent=1 // pred_check
      _
    $region19: #{tpu_custom_call.1} parent=1 // pred_check_branch
      %50 = sbr.rel (0) target = $region21
    $region20: #{tpu_custom_call.1} parent=1 // pred_region
      %s52 = ssub.s32 1024, 1024
      %53 = vsyncadd [#allocation9], %s52
      %s54 = sshll.u32 [#allocation8], 4
      %s55 = int_to_ptr.vmem [resolvable:$true] %s54
      %60 = dma.hbm_to_vmem [thread:$0]  %s4, 1024, %s55, [#allocation9], 64, 64, 4
    $region21: #{tpu_custom_call.1} parent=1 // pred_fallthru
      _
    // Predicated region
    $region22: #{tpu_custom_call.1} parent=1 // pred_check
      _
    $region23: #{tpu_custom_call.1} parent=1 // pred_check_branch
      %62 = sbr.rel (0) target = $region25
    $region24: #{tpu_custom_call.1} parent=1 // pred_region
      _
    $region25: #{tpu_custom_call.1} parent=1 // pred_fallthru
      _
    // Predicated region
    $region26: #{tpu_custom_call.1} parent=1 // pred_check
      _
    $region27: #{tpu_custom_call.1} parent=1 // pred_check_branch
      %64 = sbr.rel (0) target = $region29
    $region28: #{tpu_custom_call.1} parent=1 // pred_region
      %65 = dma.done [#allocation3], 128
    $region29: #{tpu_custom_call.1} parent=1 // pred_fallthru
      _
    // Predicated region
    $region30: #{tpu_custom_call.1} parent=1 // pred_check
      _
    $region31: #{tpu_custom_call.1} parent=1 // pred_check_branch
      %67 = sbr.rel (0) target = $region33
    $region32: #{tpu_custom_call.1} parent=1 // pred_region
      %68 = dma.done [#allocation6], 128
    $region33: #{tpu_custom_call.1} parent=1 // pred_fallthru
      _
    // Predicated region
    $region34: #{tpu_custom_call.1} parent=1 // pred_check
      _
    $region35: #{tpu_custom_call.1} parent=1 // pred_check_branch
      %70 = sbr.rel (0) target = $region37
    $region36: #{tpu_custom_call.1} parent=1 // pred_region
      %71 = dma.done [#allocation6], 1024
    $region37: #{tpu_custom_call.1} parent=1 // pred_fallthru
      _
    // Predicated region
    $region38: #{tpu_custom_call.1} parent=1 // pred_check
      _
    $region39: #{tpu_custom_call.1} parent=1 // pred_check_branch
      %73 = sbr.rel (0) target = $region41
    $region40: #{tpu_custom_call.1} parent=1 // pred_region
      %74 = dma.done [#allocation9], 1024
    $region41: #{tpu_custom_call.1} parent=1 // pred_fallthru
      _
    %v76 = vld [vmem:[#allocation2] sm:$0xff]
    %v77 = vpack.c.bf16 %v76, %v76
    %v78 = vld [vmem:[#allocation7] sm:$0xf]
    %v79 = vld [vmem:[#allocation7 + $0x4] sm:$0xf]
    %v80 = vld [vmem:[#allocation7 + $0x8] sm:$0xf]
    %v81 = vld [vmem:[#allocation7 + $0xc] sm:$0xf]
    %v82 = vld [vmem:[#allocation7 + $0x10] sm:$0xf]
    %v83 = vld [vmem:[#allocation7 + $0x14] sm:$0xf]
    %v84 = vld [vmem:[#allocation7 + $0x18] sm:$0xf]
    %v85 = vld [vmem:[#allocation7 + $0x1c] sm:$0xf]
    %v86 = vld [vmem:[#allocation7 + $0x20] sm:$0xf]
    %v87 = vld [vmem:[#allocation7 + $0x24] sm:$0xf]
    %v88 = vld [vmem:[#allocation7 + $0x28] sm:$0xf]
    %v89 = vld [vmem:[#allocation7 + $0x2c] sm:$0xf]
    %v90 = vld [vmem:[#allocation7 + $0x30] sm:$0xf]
    %v91 = vld [vmem:[#allocation7 + $0x34] sm:$0xf]
    %v92 = vld [vmem:[#allocation7 + $0x38] sm:$0xf]
    %v93 = vld [vmem:[#allocation7 + $0x3c] sm:$0xf]
    %v94 = vld [vmem:[%s3] sm:$0x1]
    %v95 = vunpack.c.l.bf16 %v94
    %v96 = vlaneseq
    %v97 = vshrl.u32 %v96, 7
    %v98 = vsub.s32 0, %v97
    %v99 = vrot.slane %v95, %v98
    %v116 = vunpack.c.l.b16 %v78
    %v117 = vunpack.c.l.b16 %v79
    %v118 = vunpack.c.l.b16 %v80
    %v119 = vunpack.c.l.b16 %v81
    %v120 = vunpack.c.l.b16 %v82
    %v121 = vunpack.c.l.b16 %v83
    %v122 = vunpack.c.l.b16 %v84
    %v123 = vunpack.c.l.b16 %v85
    %v124 = vunpack.c.l.b16 %v86
    %v125 = vunpack.c.l.b16 %v87
    %v126 = vunpack.c.l.b16 %v88
    %v127 = vunpack.c.l.b16 %v89
    %v128 = vunpack.c.l.b16 %v90
    %v129 = vunpack.c.l.b16 %v91
    %v130 = vunpack.c.l.b16 %v92
    %v131 = vunpack.c.l.b16 %v93
    %v132 = vpack.c.b16 %v117, %v116
    %v133 = vpack.c.b16 %v119, %v118
    %v134 = vpack.c.b16 %v121, %v120
    %v135 = vpack.c.b16 %v123, %v122
    %v136 = vpack.c.b16 %v125, %v124
    %v137 = vpack.c.b16 %v127, %v126
    %v138 = vpack.c.b16 %v129, %v128
    %v139 = vpack.c.b16 %v131, %v130
    %148 = vmatprep.subr.bf16.mxu0 0
    %149 = vmatpush1.bf16.msra.mxu0 %v139
    %150 = vmatprep.subr.bf16.mxu0 0
    %151 = vmatpush1.bf16.msra.mxu0 %v138
    %152 = vmatprep.subr.bf16.mxu0 0
    %153 = vmatpush1.bf16.msra.mxu0 %v137
    %154 = vmatprep.subr.bf16.mxu0 0
    %155 = vmatpush1.bf16.msra.mxu0 %v136
    %156 = vmatprep.subr.bf16.mxu0 0
    %157 = vmatpush1.bf16.msra.mxu0 %v135
    %158 = vmatprep.subr.bf16.mxu0 0
    %159 = vmatpush1.bf16.msra.mxu0 %v134
    %160 = vmatprep.subr.bf16.mxu0 0
    %161 = vmatpush1.bf16.msra.mxu0 %v133
    %162 = vmatprep.subr.bf16.mxu0 0
    %163 = vmatpush1.bf16.msra.mxu0 %v132
    %164 = vmatprep.subr.bf16.mxu0 0
    %165 = vmatpush2.bf16.msra.mxu0 0
    %166 = vmatprep.subr.bf16.mxu0 0
    %167 = vmatpush2.bf16.msra.mxu0 0
    %168 = vmatprep.subr.bf16.mxu0 0
    %169 = vmatpush2.bf16.msra.mxu0 0
    %170 = vmatprep.subr.bf16.mxu0 0
    %171 = vmatpush2.bf16.msra.mxu0 0
    %172 = vmatprep.subr.bf16.mxu0 0
    %173 = vmatpush2.bf16.msra.mxu0 0
    %174 = vmatprep.subr.bf16.mxu0 0
    %175 = vmatpush2.bf16.msra.mxu0 0
    %176 = vmatprep.subr.bf16.mxu0 0
    %177 = vmatpush2.bf16.msra.mxu0 0
    %178 = vmatprep.subr.bf16.mxu0 0
    %179 = vmatpush2.bf16.msra.mxu0 0
    %180 = vmatprep.mubr.bf16.mxu0 0
    %181 = vmatmul.mubr.bf16.gmra.mxu0 %v77
    %v182 = vpop.f32.mrf.mxu0
    %v183 = vadd.f32 %v99, %v182
    %v184 = vpop.f32.mrf.mxu0
    %v185 = vpop.f32.mrf.mxu0
    %v186 = vpop.f32.mrf.mxu0
    %187 = vdwg.mxu0
    %v188 = vmax.f32 %v183, 0.0
    %v189 = vpack.c.bf16 %v188, %v188
    %v190 = vld [vmem:[#allocation8] sm:$0xf]
    %v191 = vld [vmem:[#allocation8 + $0x4] sm:$0xf]
    %v192 = vld [vmem:[#allocation8 + $0x8] sm:$0xf]
    %v193 = vld [vmem:[#allocation8 + $0xc] sm:$0xf]
    %v194 = vld [vmem:[#allocation8 + $0x10] sm:$0xf]
    %v195 = vld [vmem:[#allocation8 + $0x14] sm:$0xf]
    %v196 = vld [vmem:[#allocation8 + $0x18] sm:$0xf]
    %v197 = vld [vmem:[#allocation8 + $0x1c] sm:$0xf]
    %v198 = vld [vmem:[#allocation8 + $0x20] sm:$0xf]
    %v199 = vld [vmem:[#allocation8 + $0x24] sm:$0xf]
    %v200 = vld [vmem:[#allocation8 + $0x28] sm:$0xf]
    %v201 = vld [vmem:[#allocation8 + $0x2c] sm:$0xf]
    %v202 = vld [vmem:[#allocation8 + $0x30] sm:$0xf]
    %v203 = vld [vmem:[#allocation8 + $0x34] sm:$0xf]
    %v204 = vld [vmem:[#allocation8 + $0x38] sm:$0xf]
    %v205 = vld [vmem:[#allocation8 + $0x3c] sm:$0xf]
    %v206 = vld [vmem:[%s5] sm:$0x1]
    %v207 = vunpack.c.l.bf16 %v206
    %v208 = vlaneseq
    %v209 = vshrl.u32 %v208, 7
    %v210 = vsub.s32 0, %v209
    %v211 = vrot.slane %v207, %v210
    %v228 = vunpack.c.l.b16 %v190
    %v229 = vunpack.c.l.b16 %v191
    %v230 = vunpack.c.l.b16 %v192
    %v231 = vunpack.c.l.b16 %v193
    %v232 = vunpack.c.l.b16 %v194
    %v233 = vunpack.c.l.b16 %v195
    %v234 = vunpack.c.l.b16 %v196
    %v235 = vunpack.c.l.b16 %v197
    %v236 = vunpack.c.l.b16 %v198
    %v237 = vunpack.c.l.b16 %v199
    %v238 = vunpack.c.l.b16 %v200
    %v239 = vunpack.c.l.b16 %v201
    %v240 = vunpack.c.l.b16 %v202
    %v241 = vunpack.c.l.b16 %v203
    %v242 = vunpack.c.l.b16 %v204
    %v243 = vunpack.c.l.b16 %v205
    %v244 = vpack.c.b16 %v229, %v228
    %v245 = vpack.c.b16 %v231, %v230
    %v246 = vpack.c.b16 %v233, %v232
    %v247 = vpack.c.b16 %v235, %v234
    %v248 = vpack.c.b16 %v237, %v236
    %v249 = vpack.c.b16 %v239, %v238
    %v250 = vpack.c.b16 %v241, %v240
    %v251 = vpack.c.b16 %v243, %v242
    %260 = vmatprep.subr.bf16.mxu0 0
    %261 = vmatpush1.bf16.msra.mxu0 %v251
    %262 = vmatprep.subr.bf16.mxu0 0
    %263 = vmatpush1.bf16.msra.mxu0 %v250
    %264 = vmatprep.subr.bf16.mxu0 0
    %265 = vmatpush1.bf16.msra.mxu0 %v249
    %266 = vmatprep.subr.bf16.mxu0 0
    %267 = vmatpush1.bf16.msra.mxu0 %v248
    %268 = vmatprep.subr.bf16.mxu0 0
    %269 = vmatpush1.bf16.msra.mxu0 %v247
    %270 = vmatprep.subr.bf16.mxu0 0
    %271 = vmatpush1.bf16.msra.mxu0 %v246
    %272 = vmatprep.subr.bf16.mxu0 0
    %273 = vmatpush1.bf16.msra.mxu0 %v245
    %274 = vmatprep.subr.bf16.mxu0 0
    %275 = vmatpush1.bf16.msra.mxu0 %v244
    %276 = vmatprep.subr.bf16.mxu0 0
    %277 = vmatpush2.bf16.msra.mxu0 0
    %278 = vmatprep.subr.bf16.mxu0 0
    %279 = vmatpush2.bf16.msra.mxu0 0
    %280 = vmatprep.subr.bf16.mxu0 0
    %281 = vmatpush2.bf16.msra.mxu0 0
    %282 = vmatprep.subr.bf16.mxu0 0
    %283 = vmatpush2.bf16.msra.mxu0 0
    %284 = vmatprep.subr.bf16.mxu0 0
    %285 = vmatpush2.bf16.msra.mxu0 0
    %286 = vmatprep.subr.bf16.mxu0 0
    %287 = vmatpush2.bf16.msra.mxu0 0
    %288 = vmatprep.subr.bf16.mxu0 0
    %289 = vmatpush2.bf16.msra.mxu0 0
    %290 = vmatprep.subr.bf16.mxu0 0
    %291 = vmatpush2.bf16.msra.mxu0 0
    %292 = vmatprep.mubr.bf16.mxu0 0
    %293 = vmatmul.mubr.bf16.gmra.mxu0 %v189
    %v294 = vpop.f32.mrf.mxu0
    %v295 = vadd.f32 %v211, %v294
    %v296 = vpop.f32.mrf.mxu0
    %v297 = vpop.f32.mrf.mxu0
    %v298 = vpop.f32.mrf.mxu0
    %299 = vdwg.mxu0
    %v300 = vlaneseq
    %v301 = vand.u32 %v300, 127
    %vm302 = vcmp.lt.s32.totalorder %v301, 8
    %v303 = vsel %vm302, %v295, -1e+30
    %304 = vmax.xlane.f32.xlu0 %v303
    %v305 = vpop.xlane.xlu0 %304
    %v306 = vsub.f32 %v303, %v305
    %v307 = vmul.f32 %v306, 1.442695
    %v308 = vpow.pop %v307
    %v309 = vsel %vm302, %v308, 0.0
    %310 = vadd.xlane.f32.xlu0 %v309
    %v311 = vpop.xlane.xlu0 %310
    %v312 = vrcp.pop %v311
    %v313 = vmul.f32 %v309, %v312
    %v314 = vld [vmem:[#allocation5] sm:$0xff]
    %v315 = vlog2.pop %v314
    %v316 = vmul.f32 %v315, 0.6931472
    %v317 = vsub.f32 0.0, %v316
    %v318 = vrcp.pop %v317
    %v319 = vmul.f32 %v309, %v318
    %v321 = vand.u32 %v319, 4294967168
    %v322 = vor.u32 %v321, %v301
    %v323 = vand.u32 %v322, 65535
    %v324 = vshra.s32 %v322, 16
    %v325 = vcvt.s32.f32 %v323
    %v326 = vcvt.s32.f32 %v324
    %327 = vmax.xlane.f32.xlu0 %v326
    %v328 = vpop.xlane.xlu0 %327
    %vm329 = vcmp.eq.f32.partialorder %v326, %v328
    %v330 = vsel %vm329, %v325, -inf
    %331 = vmax.xlane.f32.xlu0 %v330
    %v332 = vpop.xlane.xlu0 %331
    %v333 = vcvt.f32.s32 %v332
    %v334 = vcvt.f32.s32 %v328
    %v335 = vshll.u32 %v334, 16
    %v336 = vadd.s32 %v335, %v333
    %v337 = vand.u32 %v336, 127
    %v338 = vsub.f32 %v295, %v305
    %v339 = vlog2.pop %v311
    %v340 = vmul.f32 %v339, 0.6931472
    %v341 = vsub.f32 %v338, %v340
    %vm342 = vcmp.eq.s32.totalorder %v301, %v337
    %v343 = vsel %vm342, %v341, 0.0
    %344 = vadd.xlane.f32.xlu0 %v343
    %v345 = vpop.xlane.xlu0 %344
    %vm346 = vcmp.eq.s32.totalorder %v301, 8
    %vm347 = vcmp.eq.s32.totalorder %v301, 9
    %v348 = vcvt.s32.f32 %v337
    %v349 = vsel %vm347, %v348, 0.0
    %v350 = vsel %vm346, %v345, %v349
    %v351 = vsel %vm302, %v313, %v350
    %352 = vst [vmem:[#allocation10] sm:$0xff] %v351
    // Predicated region
    $region42: #{tpu_custom_call.1} parent=1 // pred_check
      _
    $region43: #{tpu_custom_call.1} parent=1 // pred_check_branch
      %354 = sbr.rel (0) target = $region45
    $region44: #{tpu_custom_call.1} parent=1 // pred_region
      %s356 = ssub.s32 128, 128
      %357 = vsyncadd [#allocation4], %s356
      %s359 = sshll.u32 [#allocation10], 4
      %s360 = int_to_ptr.vmem [resolvable:$true] %s359
      %362 = dma.vmem_to_hbm [thread:$0]  %s360, 128, %s6, [#allocation4]
    $region45: #{tpu_custom_call.1} parent=1 // pred_fallthru
      _
    // Predicated region
    $region46: #{tpu_custom_call.1} parent=1 // pred_check
      _
    $region47: #{tpu_custom_call.1} parent=1 // pred_check_branch
      %364 = sbr.rel (0) target = $region49
    $region48: #{tpu_custom_call.1} parent=1 // pred_region
      %365 = dma.done [#allocation4], 128
    $region49: #{tpu_custom_call.1} parent=1 // pred_fallthru
      _
    %366 = vsyncpa [#allocation3], 1
    %367 = vsyncpa [#allocation6], 1
    %368 = vsyncpa [#allocation9], 1
    %369 = vsyncpa [#allocation4], 1

</llo_original>
